<compile_context>
chip_gen: v7x
topology: tpu7x:2x2x1
jax: 0.10.0
libtpu: 0.0.40
codegen_flags: <defaults>
</compile_context>

<pallas_src>
import functools

import numpy as np
import jax
import jax.numpy as jnp
from jax.experimental import pallas as pl
from jax.experimental.pallas import tpu as pltpu


def _senet_kernel(x_ref, pw1_ref, w2t_ref, e_ref, o_ref):
    x = x_ref[...]                                                            # [tb, g*D]
    # segment-mean pooling fused into the first excitation Linear (no bias) + ReLU
    h = jnp.maximum(
        jnp.dot(x, pw1_ref[...], preferred_element_type=jnp.float32), 0.0)    # [tb, g*R]
    # second excitation Linear (no bias) + Sigmoid
    gate = jax.nn.sigmoid(
        jnp.dot(h, w2t_ref[...], preferred_element_type=jnp.float32))         # [tb, g*F]
    # repeat_interleave(gate, length_per_key, dim=1)  ==  gate @ E (block-diag expand)
    gate_full = jnp.dot(gate, e_ref[...], preferred_element_type=jnp.float32)  # [tb, g*D]
    o_ref[...] = (x * gate_full).astype(o_ref.dtype)


def _build_segment_matrices(length_per_key):
    """Static pooling / expand matrices for the segment ops (built with numpy)."""
    d_total = int(sum(length_per_key))
    f = len(length_per_key)
    p = np.zeros((d_total, f), np.float32)
    e = np.zeros((f, d_total), np.float32)
    off = 0
    for i, ln in enumerate(length_per_key):
        p[off:off + ln, i] = 1.0 / float(ln)
        e[i, off:off + ln] = 1.0
        off += ln
    return p, e


def _pick_tile_rows(n_rows, target):
    """Largest batch tile <= target that divides n_rows and is a multiple of 8."""
    if n_rows <= target:
        return n_rows
    t = (target // 8) * 8
    while t >= 8:
        if n_rows % t == 0:
            return t
        t -= 8
    return n_rows  # full array is always a legal block shape


@functools.partial(jax.jit, static_argnames=("length_per_key", "tile_rows"))
def input_senet(x, w1, w2, *, length_per_key, tile_rows=1024):
    """x: [B, sum(length_per_key)] f32; w1: [R, F]; w2: [F, R] (nn.Linear, no bias)."""
    b, d_total = x.shape
    length_per_key = tuple(int(l) for l in length_per_key)
    assert d_total == sum(length_per_key)
    f = len(length_per_key)
    r = w1.shape[0]

    # Lane-packing factor: pack `g` batch rows into one 128-lane row when possible.
    g = 128 // d_total if (d_total <= 128 and 128 % d_total == 0) else 1
    if g > 1 and b % g != 0:
        g = 1

    p_np, e_np = _build_segment_matrices(length_per_key)
    eye_np = np.eye(g, dtype=np.float32)
    eye_j = jnp.eye(g, dtype=x.dtype)
    # Fold mean-pooling into the first Linear:  relu((x @ P) @ W1.T) == relu(x @ (P @ W1.T))
    pw1 = jnp.kron(eye_j, jnp.asarray(p_np) @ w1.T)      # [g*D, g*R]
    w2t = jnp.kron(eye_j, w2.T)                          # [g*R, g*F]
    e_mat = jnp.asarray(np.kron(eye_np, e_np))           # [g*F, g*D] (baked constant)

    d_packed = g * d_total
    f_packed = g * f
    r_packed = g * r
    n_rows = b // g
    xp = x.reshape(n_rows, d_packed)

    # VMEM budget guard (in + out tiles, double-buffered, f32); keeps headroom on
    # v7x's smaller (32 MiB scoped / 64 MiB physical) VMEM.
    bytes_per_row = d_packed * 4 * 4
    max_rows_by_vmem = max(8, (8 * 1024 * 1024) // bytes_per_row)
    tb = _pick_tile_rows(n_rows, min(int(tile_rows), max_rows_by_vmem))

    grid = (n_rows // tb,)
    out_packed = pl.pallas_call(
        _senet_kernel,
        out_shape=jax.ShapeDtypeStruct((n_rows, d_packed), x.dtype),
        grid_spec=pltpu.PrefetchScalarGridSpec(
            num_scalar_prefetch=0,
            grid=grid,
            in_specs=[
                pl.BlockSpec((tb, d_packed), lambda i: (i, 0)),        # x tile (lane-dense)
                pl.BlockSpec((d_packed, r_packed), lambda i: (0, 0)),  # kron(I_g, P @ W1.T)
                pl.BlockSpec((r_packed, f_packed), lambda i: (0, 0)),  # kron(I_g, W2.T)
                pl.BlockSpec((f_packed, d_packed), lambda i: (0, 0)),  # expand (block-diag)
            ],
            out_specs=pl.BlockSpec((tb, d_packed), lambda i: (i, 0)),
        ),
        compiler_params=pltpu.CompilerParams(
            dimension_semantics=("parallel",),   # batch axis shards across v7x's 2 TCs
        ),
    )(xp, pw1, w2t, e_mat)
    return out_packed.reshape(b, d_total)


def _reference(x, w1, w2, length_per_key):
    """Pure-JAX reference of the PyTorch forward."""
    splits = np.cumsum(np.array(length_per_key))[:-1].tolist()
    segs = jnp.split(x, splits, axis=1)
    xx = jnp.stack([s.mean(axis=1) for s in segs], axis=1)          # [B, F]
    h = jnp.maximum(xx @ w1.T, 0.0)
    gate = jax.nn.sigmoid(h @ w2.T)                                 # [B, F]
    gate_full = jnp.concatenate(
        [jnp.repeat(gate[:, i:i + 1], ln, axis=1)
         for i, ln in enumerate(length_per_key)], axis=1)
    return x * gate_full


if __name__ == "__main__":
    # InputSENet(length_per_key=[4, 8, 16, 4], reduction_ratio=2)
    length_per_key = (4, 8, 16, 4)
    field_size = len(length_per_key)                 # 4
    reduction_size = max(1, field_size // 2)         # 2
    d_total = sum(length_per_key)                    # 32
    batch = 256                                      # packs to 64 lane-dense rows

    key = jax.random.PRNGKey(0)
    kx, k1, k2 = jax.random.split(key, 3)
    x = jax.random.normal(kx, (batch, d_total), jnp.float32)
    # nn.Linear weight shapes: [out, in], no bias.
    w1 = jax.random.normal(k1, (reduction_size, field_size), jnp.float32) * 0.5
    w2 = jax.random.normal(k2, (field_size, reduction_size), jnp.float32) * 0.5

    # tile_rows=16 packed rows -> grid of 4 steps (even count, splits across 2 TCs).
    out = input_senet(x, w1, w2, length_per_key=length_per_key, tile_rows=16)
    out = jax.block_until_ready(out)

    ref = _reference(x, w1, w2, length_per_key)
    assert out.shape == (batch, d_total)
    assert jnp.allclose(out, ref, atol=3e-5, rtol=3e-5)
    print("KERNEL_OK")
</pallas_src>

<mosaic_0001>
module attributes {stable_mosaic.version = 11 : i64} {
  func.func @_senet_kernel(%arg0: i32, %arg1: memref<16x128xf32, #tpu.memory_space<vmem>>, %arg2: memref<128x8xf32, #tpu.memory_space<vmem>>, %arg3: memref<8x16xf32, #tpu.memory_space<vmem>>, %arg4: memref<16x128xf32, #tpu.memory_space<vmem>>, %arg5: memref<16x128xf32, #tpu.memory_space<vmem>>) attributes {dimension_semantics = [#tpu.dimension_semantics<parallel>], iteration_bounds = array<i64: 4>, scalar_prefetch = 0 : i64, scratch_operands = 0 : i64, tpu.core_type = #tpu.core_type<tc>, window_params = [{transform_indices = @transform_0, window_bounds = array<i64: 16, 128>}, {pipeline_mode = #tpu.pipeline_mode<synchronous>, transform_indices = @transform_1, window_bounds = array<i64: 128, 8>}, {pipeline_mode = #tpu.pipeline_mode<synchronous>, transform_indices = @transform_2, window_bounds = array<i64: 8, 16>}, {pipeline_mode = #tpu.pipeline_mode<synchronous>, transform_indices = @transform_3, window_bounds = array<i64: 16, 128>}, {transform_indices = @transform_4, window_bounds = array<i64: 16, 128>}]} {
    %c0 = arith.constant 0 : index
    %c0_0 = arith.constant 0 : index
    %0 = vector.load %arg1[%c0, %c0_0] : memref<16x128xf32, #tpu.memory_space<vmem>>, vector<16x128xf32>
    %c0_1 = arith.constant 0 : index
    %c0_2 = arith.constant 0 : index
    %1 = vector.load %arg2[%c0_1, %c0_2] : memref<128x8xf32, #tpu.memory_space<vmem>>, vector<128x8xf32>
    %cst = arith.constant dense<0.000000e+00> : vector<16x8xf32>
    %2 = tpu.matmul %0, %1, %cst {dimension_numbers = #tpu.dot_dimension_numbers<[1], [0], [0], [1], [0, 0, 1, 1], [], []>} : vector<16x128xf32>, vector<128x8xf32>, vector<16x8xf32> -> vector<16x8xf32>
    %cst_3 = arith.constant 0.000000e+00 : f32
    %3 = vector.broadcast %cst_3 : f32 to vector<16x8xf32>
    %4 = arith.maximumf %2, %3 : vector<16x8xf32>
    %c0_4 = arith.constant 0 : index
    %c0_5 = arith.constant 0 : index
    %5 = vector.load %arg3[%c0_4, %c0_5] : memref<8x16xf32, #tpu.memory_space<vmem>>, vector<8x16xf32>
    %cst_6 = arith.constant dense<0.000000e+00> : vector<16x16xf32>
    %6 = tpu.matmul %4, %5, %cst_6 {dimension_numbers = #tpu.dot_dimension_numbers<[1], [0], [0], [1], [0, 0, 1, 1], [], []>} : vector<16x8xf32>, vector<8x16xf32>, vector<16x16xf32> -> vector<16x16xf32>
    %7 = arith.negf %6 : vector<16x16xf32>
    %8 = math.exp %7 : vector<16x16xf32>
    %cst_7 = arith.constant 1.000000e+00 : f32
    %9 = vector.broadcast %cst_7 : f32 to vector<16x16xf32>
    %10 = arith.addf %9, %8 : vector<16x16xf32>
    %11 = arith.divf %9, %10 : vector<16x16xf32>
    %c0_8 = arith.constant 0 : index
    %c0_9 = arith.constant 0 : index
    %12 = vector.load %arg4[%c0_8, %c0_9] : memref<16x128xf32, #tpu.memory_space<vmem>>, vector<16x128xf32>
    %cst_10 = arith.constant dense<0.000000e+00> : vector<16x128xf32>
    %13 = tpu.matmul %11, %12, %cst_10 {dimension_numbers = #tpu.dot_dimension_numbers<[1], [0], [0], [1], [0, 0, 1, 1], [], []>} : vector<16x16xf32>, vector<16x128xf32>, vector<16x128xf32> -> vector<16x128xf32>
    %14 = arith.mulf %0, %13 : vector<16x128xf32>
    %c0_11 = arith.constant 0 : index
    %c0_12 = arith.constant 0 : index
    %15 = vector.load %arg5[%c0_11, %c0_12] : memref<16x128xf32, #tpu.memory_space<vmem>>, vector<16x128xf32>
    tpu.vector_store %arg5[%c0_11, %c0_12], %14 {strides = array<i32>} : memref<16x128xf32, #tpu.memory_space<vmem>>, vector<16x128xf32>,
    return
  }
  func.func @transform_0(%arg0: i32) -> (i32, i32) {
    %c0_i32 = arith.constant 0 : i32
    %c0_i32_0 = arith.constant 0 : i32
    return %arg0, %c0_i32 : i32, i32
  }
  func.func @transform_1(%arg0: i32) -> (i32, i32) {
    %c0_i32 = arith.constant 0 : i32
    %c0_i32_0 = arith.constant 0 : i32
    %c0_i32_1 = arith.constant 0 : i32
    return %c0_i32, %c0_i32_0 : i32, i32
  }
  func.func @transform_2(%arg0: i32) -> (i32, i32) {
    %c0_i32 = arith.constant 0 : i32
    %c0_i32_0 = arith.constant 0 : i32
    %c0_i32_1 = arith.constant 0 : i32
    return %c0_i32, %c0_i32_0 : i32, i32
  }
  func.func @transform_3(%arg0: i32) -> (i32, i32) {
    %c0_i32 = arith.constant 0 : i32
    %c0_i32_0 = arith.constant 0 : i32
    %c0_i32_1 = arith.constant 0 : i32
    return %c0_i32, %c0_i32_0 : i32, i32
  }
  func.func @transform_4(%arg0: i32) -> (i32, i32) {
    %c0_i32 = arith.constant 0 : i32
    %c0_i32_0 = arith.constant 0 : i32
    return %arg0, %c0_i32 : i32, i32
  }
}

</mosaic_0001>

<llo_original>
// kernel: input_senet.1
$region0: #{input_senet.1}
  #allocation0 [shape = 'u32[]', space=smem, size = 0x4, offset = 0x4, fixed_abs, tag = 'smem constant byte address 0x4 - core index']
  #allocation1 [shape = 'u32[144,128]{1,0:T(1,128)}', space=vmem, size = 0x12000, scoped, tag = 'internal scratch']
  %s0 = inlined_call_operand.vmem [shape: f32[64,128], index: 0, kind: input, shape index: {}]
  %s1 = inlined_call_operand.vmem [shape: f32[128,8], index: 1, kind: input, shape index: {}]
  %s2 = inlined_call_operand.vmem [shape: f32[8,16], index: 2, kind: input, shape index: {}]
  %s3 = inlined_call_operand.vmem [shape: f32[16,128], index: 3, kind: input, shape index: {}]
  %s4 = inlined_call_operand.vmem [shape: f32[64,128], index: 4, kind: output, shape index: {}]
  %s5 = sld [smem:[#allocation0]]
  $region49: #{input_senet.1} parent=0
    _
  %s7 = ssub.s32 1, %s5
  %s8 = scalar_select 0, %s7, %s5
  loop: start=0, step=1, limit=6
  $region2: #{input_senet.1} parent=0 // loop_pre_header
    _
  $region3: #{input_senet.1} parent=0 // loop_header
    %s10 = sphi 0, %s14
    %p11 = scmp.ge.s32.totalorder %s10, 6
    %s20 = sphi 0, %s22
    %s23 = sphi 0, %s20
    %s24 = sphi 0, %s23
    %s40 = sphi 0, %s24
    %s44 = sphi 0, %s44
    %s46 = sphi 0, %s44
    %s47 = sphi 0, %s46
    %s61 = sphi 0, %s47
    %s65 = sphi 0, %s65
    %s67 = sphi 0, %s65
    %s68 = sphi 0, %s67
    %s82 = sphi 0, %s68
    %s86 = sphi 0, %s86
    %s88 = sphi 0, %s86
    %s89 = sphi 0, %s88
    %s103 = sphi 0, %s89
    %s109 = sphi 0, %s111
    %s112 = sphi 0, %s109
    %s113 = sphi 0, %s112
    %s129 = sphi 0, %s113
  $region4: #{input_senet.1} parent=0 // loop_header_branch
    %13 = sbr.rel (%p11) target = $region8
  $region5: #{input_senet.1} parent=0 // loop_body
    %s15 = ssub.s32 %s10, 1
    %s16 = ssub.s32 %s10, 2
    %s17 = sadd.s32 %s10, 1
    %s18 = ssub.s32 %s10, %s17
    %p19 = scmp.eq.s32.totalorder %s18, 0
    %s21 = sadd.s32 %s20, 1
    %s22 = scalar_select %p19, %s20, %s21
    %p25 = pneg %p19
    %p26 = scmp.eq.s32.totalorder %s10, 3
    %p27 = por %p25, %p26
    %p28 = scmp.ne.s32.totalorder %s20, %s23
    %p29 = scmp.eq.s32.totalorder %s10, 0
    %p30 = por %p28, %p29
    %p31 = scmp.ne.s32.totalorder %s20, %s23
    %p32 = scmp.eq.s32.totalorder %s15, 3
    %p33 = por %p31, %p32
    %p34 = scmp.ne.s32.totalorder %s23, %s24
    %p35 = scmp.eq.s32.totalorder %s15, 0
    %p36 = por %p34, %p35
    %p37 = scmp.ne.s32.totalorder %s23, %s24
    %p38 = scmp.eq.s32.totalorder %s16, 3
    %p39 = por %p37, %p38
    %p41 = scmp.ne.s32.totalorder %s24, %s40
    %p42 = scmp.eq.s32.totalorder %s16, 0
    %p43 = por %p41, %p42
    %s45 = sadd.s32 %s44, 1
    %p48 = scmp.eq.s32.totalorder %s10, 3
    %p49 = scmp.ne.s32.totalorder %s44, %s46
    %p50 = scmp.eq.s32.totalorder %s10, 0
    %p51 = por %p49, %p50
    %p52 = scmp.ne.s32.totalorder %s44, %s46
    %p53 = scmp.eq.s32.totalorder %s15, 3
    %p54 = por %p52, %p53
    %p55 = scmp.ne.s32.totalorder %s46, %s47
    %p56 = scmp.eq.s32.totalorder %s15, 0
    %p57 = por %p55, %p56
    %p58 = scmp.ne.s32.totalorder %s46, %s47
    %p59 = scmp.eq.s32.totalorder %s16, 3
    %p60 = por %p58, %p59
    %p62 = scmp.ne.s32.totalorder %s47, %s61
    %p63 = scmp.eq.s32.totalorder %s16, 0
    %p64 = por %p62, %p63
    %s66 = sadd.s32 %s65, 1
    %p69 = scmp.eq.s32.totalorder %s10, 3
    %p70 = scmp.ne.s32.totalorder %s65, %s67
    %p71 = scmp.eq.s32.totalorder %s10, 0
    %p72 = por %p70, %p71
    %p73 = scmp.ne.s32.totalorder %s65, %s67
    %p74 = scmp.eq.s32.totalorder %s15, 3
    %p75 = por %p73, %p74
    %p76 = scmp.ne.s32.totalorder %s67, %s68
    %p77 = scmp.eq.s32.totalorder %s15, 0
    %p78 = por %p76, %p77
    %p79 = scmp.ne.s32.totalorder %s67, %s68
    %p80 = scmp.eq.s32.totalorder %s16, 3
    %p81 = por %p79, %p80
    %p83 = scmp.ne.s32.totalorder %s68, %s82
    %p84 = scmp.eq.s32.totalorder %s16, 0
    %p85 = por %p83, %p84
    %s87 = sadd.s32 %s86, 1
    %p90 = scmp.eq.s32.totalorder %s10, 3
    %p91 = scmp.ne.s32.totalorder %s86, %s88
    %p92 = scmp.eq.s32.totalorder %s10, 0
    %p93 = por %p91, %p92
    %p94 = scmp.ne.s32.totalorder %s86, %s88
    %p95 = scmp.eq.s32.totalorder %s15, 3
    %p96 = por %p94, %p95
    %p97 = scmp.ne.s32.totalorder %s88, %s89
    %p98 = scmp.eq.s32.totalorder %s15, 0
    %p99 = por %p97, %p98
    %p100 = scmp.ne.s32.totalorder %s88, %s89
    %p101 = scmp.eq.s32.totalorder %s16, 3
    %p102 = por %p100, %p101
    %p104 = scmp.ne.s32.totalorder %s89, %s103
    %p105 = scmp.eq.s32.totalorder %s16, 0
    %p106 = por %p104, %p105
    %s107 = ssub.s32 %s10, %s17
    %p108 = scmp.eq.s32.totalorder %s107, 0
    %s110 = sadd.s32 %s109, 1
    %s111 = scalar_select %p108, %s109, %s110
    %p114 = pneg %p108
    %p115 = scmp.eq.s32.totalorder %s10, 3
    %p116 = por %p114, %p115
    %p117 = scmp.ne.s32.totalorder %s109, %s112
    %p118 = scmp.eq.s32.totalorder %s10, 0
    %p119 = por %p117, %p118
    %p120 = scmp.ne.s32.totalorder %s109, %s112
    %p121 = scmp.eq.s32.totalorder %s15, 3
    %p122 = por %p120, %p121
    %p123 = scmp.ne.s32.totalorder %s112, %s113
    %p124 = scmp.eq.s32.totalorder %s15, 0
    %p125 = por %p123, %p124
    %p126 = scmp.ne.s32.totalorder %s112, %s113
    %p127 = scmp.eq.s32.totalorder %s16, 3
    %p128 = por %p126, %p127
    %p130 = scmp.ne.s32.totalorder %s113, %s129
    %p131 = scmp.eq.s32.totalorder %s16, 0
    %p132 = por %p130, %p131
    %p133 = scmp.le.s32.totalorder 1, %s10
    %p134 = scmp.lt.s32.totalorder %s10, 5
    %p135 = pnand %p133, %p134
    %p136 = pneg %p135
    // Predicated region
    $region9: #{input_senet.1} parent=5 // pred_check
      _
    $region10: #{input_senet.1} parent=5 // pred_check_branch
      %138 = sbr.rel (%p135) target = $region12
    $region11: #{input_senet.1} parent=5 // pred_region
      %s139 = ssub.s32 %s10, 1
      // Predicated region
      $region13: #{input_senet.1} parent=11 // pred_check
        %p140 = pneg %p57
      $region14: #{input_senet.1} parent=11 // pred_check_branch
        %142 = sbr.rel (%p140) target = $region16
      $region15: #{input_senet.1} parent=11 // pred_region
        _
      $region16: #{input_senet.1} parent=11 // pred_fallthru
        _
      // Predicated region
      $region17: #{input_senet.1} parent=11 // pred_check
        %p143 = pneg %p78
      $region18: #{input_senet.1} parent=11 // pred_check_branch
        %145 = sbr.rel (%p143) target = $region20
      $region19: #{input_senet.1} parent=11 // pred_region
        _
      $region20: #{input_senet.1} parent=11 // pred_fallthru
        _
      // Predicated region
      $region21: #{input_senet.1} parent=11 // pred_check
        %p146 = pneg %p99
      $region22: #{input_senet.1} parent=11 // pred_check_branch
        %148 = sbr.rel (%p146) target = $region24
      $region23: #{input_senet.1} parent=11 // pred_region
        _
      $region24: #{input_senet.1} parent=11 // pred_fallthru
        _
    $region12: #{input_senet.1} parent=5 // pred_fallthru
      _
    %p149 = scmp.lt.s32.totalorder %s10, 4
    // Predicated region
    $region25: #{input_senet.1} parent=5 // pred_check
      %p150 = pneg %p149
    $region26: #{input_senet.1} parent=5 // pred_check_branch
      %152 = sbr.rel (%p150) target = $region28
    $region27: #{input_senet.1} parent=5 // pred_region
      // Predicated region
      $region29: #{input_senet.1} parent=27 // pred_check
        %p153 = pneg %p30
      $region30: #{input_senet.1} parent=27 // pred_check_branch
        %155 = sbr.rel (%p153) target = $region32
      $region31: #{input_senet.1} parent=27 // pred_region
        %s156 = smul.u32 2, %s10
        %p157 = scmp.lt.s32.totalorder %s156, 7
        %s158 = scalar_select %p157, %s156, 7
        %s159 = smul.addr %s158, 8
        %s160 = scalar_lea.vmem %s0, %s159
        %s161 = smul.u32 2, %s10
      $region32: #{input_senet.1} parent=27 // pred_fallthru
        _
    $region28: #{input_senet.1} parent=5 // pred_fallthru
      _
    %p162 = scmp.le.s32.totalorder 1, %s10
    %p163 = scmp.lt.s32.totalorder %s10, 5
    %p164 = pnand %p162, %p163
    %p165 = pneg %p164
    // Predicated region
    $region33: #{input_senet.1} parent=5 // pred_check
      _
    $region34: #{input_senet.1} parent=5 // pred_check_branch
      %167 = sbr.rel (%p164) target = $region36
    $region35: #{input_senet.1} parent=5 // pred_region
      %s168 = ssub.s32 %s10, 1
      %s169 = smul.u32 2, %s15
      %p170 = scmp.lt.s32.totalorder %s169, 7
      %s171 = scalar_select %p170, %s169, 7
      %s172 = smul.addr %s171, 8
      %s173 = scalar_lea.vmem %s0, %s172
      %p174 = pneg %p36
      %p175 = pneg %p33
      %p176 = pneg %p57
      %p177 = pneg %p54
      %p178 = pneg %p78
      %p179 = pneg %p75
      %p180 = pneg %p99
      %p181 = pneg %p96
      %p182 = pneg %p125
      %p183 = pneg %p122
      %s184 = smul.u32 2, %s15
      %p185 = scmp.lt.s32.totalorder %s184, 7
      %s186 = scalar_select %p185, %s184, 7
      %s187 = smul.addr %s186, 8
      %s188 = scalar_lea.vmem %s4, %s187
      %s189 = smul.u32 2, %s15
      %p190 = scmp.lt.s32.totalorder %s189, 7
      %s191 = scalar_select %p190, %s189, 7
      %s192 = smul.addr %s191, 8
      %s193 = scalar_lea.vmem %s0, %s192
      %s194 = smul.u32 2, %s15
      %s195 = smul.u32 2, %s15
      %p196 = scmp.lt.s32.totalorder %s195, 7
      %s197 = scalar_select %p196, %s195, 7
      %s198 = smul.addr %s197, 8
      %s199 = scalar_lea.vmem %s4, %s198
      %s200 = smul.u32 2, %s15
      %v201 = vld [vmem:[%s193] sm:$0xff]
      %v202 = vld [vmem:[%s193 + $0x8] sm:$0xff]
      %v203 = vld [vmem:[%s1] sm:$0xff]
      %v204 = vld [vmem:[%s1 + $0x8] sm:$0xff]
      %v205 = vld [vmem:[%s1 + $0x10] sm:$0xff]
      %v206 = vld [vmem:[%s1 + $0x18] sm:$0xff]
      %v207 = vld [vmem:[%s1 + $0x20] sm:$0xff]
      %v208 = vld [vmem:[%s1 + $0x28] sm:$0xff]
      %v209 = vld [vmem:[%s1 + $0x30] sm:$0xff]
      %v210 = vld [vmem:[%s1 + $0x38] sm:$0xff]
      %v211 = vld [vmem:[%s1 + $0x40] sm:$0xff]
      %v212 = vld [vmem:[%s1 + $0x48] sm:$0xff]
      %v213 = vld [vmem:[%s1 + $0x50] sm:$0xff]
      %v214 = vld [vmem:[%s1 + $0x58] sm:$0xff]
      %v215 = vld [vmem:[%s1 + $0x60] sm:$0xff]
      %v216 = vld [vmem:[%s1 + $0x68] sm:$0xff]
      %v217 = vld [vmem:[%s1 + $0x70] sm:$0xff]
      %v218 = vld [vmem:[%s1 + $0x78] sm:$0xff]
      %219 = vmatprep.subr.mxu0 0.0
      %220 = vmatpush1.msra.mxu0 %v203
      %221 = vmatprep.subr.mxu0 0.0
      %222 = vmatpush1.msra.mxu0 %v204
      %223 = vmatprep.subr.mxu0 0.0
      %224 = vmatpush1.msra.mxu0 %v205
      %225 = vmatprep.subr.mxu0 0.0
      %226 = vmatpush1.msra.mxu0 %v206
      %227 = vmatprep.subr.mxu0 0.0
      %228 = vmatpush1.msra.mxu0 %v207
      %229 = vmatprep.subr.mxu0 0.0
      %230 = vmatpush1.msra.mxu0 %v208
      %231 = vmatprep.subr.mxu0 0.0
      %232 = vmatpush1.msra.mxu0 %v209
      %233 = vmatprep.subr.mxu0 0.0
      %234 = vmatpush1.msra.mxu0 %v210
      %235 = vmatprep.subr.mxu0 0.0
      %236 = vmatpush1.msra.mxu0 %v211
      %237 = vmatprep.subr.mxu0 0.0
      %238 = vmatpush1.msra.mxu0 %v212
      %239 = vmatprep.subr.mxu0 0.0
      %240 = vmatpush1.msra.mxu0 %v213
      %241 = vmatprep.subr.mxu0 0.0
      %242 = vmatpush1.msra.mxu0 %v214
      %243 = vmatprep.subr.mxu0 0.0
      %244 = vmatpush1.msra.mxu0 %v215
      %245 = vmatprep.subr.mxu0 0.0
      %246 = vmatpush1.msra.mxu0 %v216
      %247 = vmatprep.subr.mxu0 0.0
      %248 = vmatpush1.msra.mxu0 %v217
      %249 = vmatprep.subr.mxu0 0.0
      %250 = vmatpush1.msra.mxu0 %v218
      %251 = vmatprep.subr.mxu0 0.0
      %252 = vmatpush1.msra.mxu0 0.0
      %253 = vmatprep.subr.mxu0 0.0
      %254 = vmatpush1.msra.mxu0 0.0
      %255 = vmatprep.subr.mxu0 0.0
      %256 = vmatpush1.msra.mxu0 0.0
      %257 = vmatprep.subr.mxu0 0.0
      %258 = vmatpush1.msra.mxu0 0.0
      %259 = vmatprep.subr.mxu0 0.0
      %260 = vmatpush1.msra.mxu0 0.0
      %261 = vmatprep.subr.mxu0 0.0
      %262 = vmatpush1.msra.mxu0 0.0
      %263 = vmatprep.subr.mxu0 0.0
      %264 = vmatpush1.msra.mxu0 0.0
      %265 = vmatprep.subr.mxu0 0.0
      %266 = vmatpush1.msra.mxu0 0.0
      %267 = vmatprep.subr.mxu0 0.0
      %268 = vmatpush1.msra.mxu0 0.0
      %269 = vmatprep.subr.mxu0 0.0
      %270 = vmatpush1.msra.mxu0 0.0
      %271 = vmatprep.subr.mxu0 0.0
      %272 = vmatpush1.msra.mxu0 0.0
      %273 = vmatprep.subr.mxu0 0.0
      %274 = vmatpush1.msra.mxu0 0.0
      %275 = vmatprep.subr.mxu0 0.0
      %276 = vmatpush1.msra.mxu0 0.0
      %277 = vmatprep.subr.mxu0 0.0
      %278 = vmatpush1.msra.mxu0 0.0
      %279 = vmatprep.subr.mxu0 0.0
      %280 = vmatpush1.msra.mxu0 0.0
      %281 = vmatprep.subr.mxu0 0.0
      %282 = vmatpush1.msra.mxu0 0.0
      %283 = vmatprep.mubr.f32.mxu0 0.0
      %284 = vmatmul.mubr.f32.gmra.mrb[0].mxu0 %v201
      %v285 = vpop.f32.mrb[0].mxu0
      %v286 = vadd.f32 0.0, %v285
      %v287 = vpop.f32.mrb[0].mxu0
      %288 = vmatprep.mubr.f32.mxu0 0.0
      %289 = vmatmul.mubr.f32.gmra.mrb[0].mxu0 %v202
      %v290 = vpop.f32.mrb[0].mxu0
      %v291 = vadd.f32 0.0, %v290
      %v292 = vpop.f32.mrb[0].mxu0
      %293 = vdwg.mxu0
      %v294 = vmax.f32 %v286, 0.0
      %v295 = vmax.f32 %v291, 0.0
      %v296 = vld [vmem:[%s2] sm:$0xff]
      %vm297 = vcmask 64512
      %v299 = vsel %vm297, %v294, 0
      %v302 = vsel %vm297, %v295, 0
      %304 = vmatprep.subr.mxu0 0.0
      %305 = vmatpush1.msra.mxu0 %v296
      %306 = vmatprep.subr.mxu0 0.0
      %307 = vmatpush1.msra.mxu0 0.0
      %308 = vmatprep.subr.mxu0 0.0
      %309 = vmatpush1.msra.mxu0 0.0
      %310 = vmatprep.subr.mxu0 0.0
      %311 = vmatpush1.msra.mxu0 0.0
      %312 = vmatprep.subr.mxu0 0.0
      %313 = vmatpush1.msra.mxu0 0.0
      %314 = vmatprep.subr.mxu0 0.0
      %315 = vmatpush1.msra.mxu0 0.0
      %316 = vmatprep.subr.mxu0 0.0
      %317 = vmatpush1.msra.mxu0 0.0
      %318 = vmatprep.subr.mxu0 0.0
      %319 = vmatpush1.msra.mxu0 0.0
      %320 = vmatprep.subr.mxu0 0.0
      %321 = vmatpush1.msra.mxu0 0.0
      %322 = vmatprep.subr.mxu0 0.0
      %323 = vmatpush1.msra.mxu0 0.0
      %324 = vmatprep.subr.mxu0 0.0
      %325 = vmatpush1.msra.mxu0 0.0
      %326 = vmatprep.subr.mxu0 0.0
      %327 = vmatpush1.msra.mxu0 0.0
      %328 = vmatprep.subr.mxu0 0.0
      %329 = vmatpush1.msra.mxu0 0.0
      %330 = vmatprep.subr.mxu0 0.0
      %331 = vmatpush1.msra.mxu0 0.0
      %332 = vmatprep.subr.mxu0 0.0
      %333 = vmatpush1.msra.mxu0 0.0
      %334 = vmatprep.subr.mxu0 0.0
      %335 = vmatpush1.msra.mxu0 0.0
      %336 = vmatprep.subr.mxu0 0.0
      %337 = vmatpush1.msra.mxu0 0.0
      %338 = vmatprep.subr.mxu0 0.0
      %339 = vmatpush1.msra.mxu0 0.0
      %340 = vmatprep.subr.mxu0 0.0
      %341 = vmatpush1.msra.mxu0 0.0
      %342 = vmatprep.subr.mxu0 0.0
      %343 = vmatpush1.msra.mxu0 0.0
      %344 = vmatprep.subr.mxu0 0.0
      %345 = vmatpush1.msra.mxu0 0.0
      %346 = vmatprep.subr.mxu0 0.0
      %347 = vmatpush1.msra.mxu0 0.0
      %348 = vmatprep.subr.mxu0 0.0
      %349 = vmatpush1.msra.mxu0 0.0
      %350 = vmatprep.subr.mxu0 0.0
      %351 = vmatpush1.msra.mxu0 0.0
      %352 = vmatprep.subr.mxu0 0.0
      %353 = vmatpush1.msra.mxu0 0.0
      %354 = vmatprep.subr.mxu0 0.0
      %355 = vmatpush1.msra.mxu0 0.0
      %356 = vmatprep.subr.mxu0 0.0
      %357 = vmatpush1.msra.mxu0 0.0
      %358 = vmatprep.subr.mxu0 0.0
      %359 = vmatpush1.msra.mxu0 0.0
      %360 = vmatprep.subr.mxu0 0.0
      %361 = vmatpush1.msra.mxu0 0.0
      %362 = vmatprep.subr.mxu0 0.0
      %363 = vmatpush1.msra.mxu0 0.0
      %364 = vmatprep.subr.mxu0 0.0
      %365 = vmatpush1.msra.mxu0 0.0
      %366 = vmatprep.subr.mxu0 0.0
      %367 = vmatpush1.msra.mxu0 0.0
      %368 = vmatprep.mubr.f32.mxu0 0.0
      %369 = vmatmul.mubr.f32.gmra.mrb[0].mxu0 %v299
      %v370 = vpop.f32.mrb[0].mxu0
      %v371 = vadd.f32 0.0, %v370
      %v372 = vpop.f32.mrb[0].mxu0
      %373 = vmatprep.mubr.f32.mxu0 0.0
      %374 = vmatmul.mubr.f32.gmra.mrb[0].mxu0 %v302
      %v375 = vpop.f32.mrb[0].mxu0
      %v376 = vadd.f32 0.0, %v375
      %v377 = vpop.f32.mrb[0].mxu0
      %378 = vdwg.mxu0
      %v379 = vxor.u32 %v371, 2147483648
      %v380 = vxor.u32 %v376, 2147483648
      %v381 = vmul.f32 %v379, 1.442695
      %v382 = vpow.pop %v381
      %v383 = vmul.f32 %v380, 1.442695
      %v384 = vpow.pop %v383
      %v385 = vadd.f32 %v382, 1.0
      %v386 = vadd.f32 %v384, 1.0
      %v387 = vrcp.pop %v385
      %v388 = vmul.f32 1.0, %v387
      %v389 = vrcp.pop %v386
      %v390 = vmul.f32 1.0, %v389
      %v391 = vld [vmem:[%s3] sm:$0xff]
      %v392 = vld [vmem:[%s3 + $0x8] sm:$0xff]
      %vm393 = vcmask 130048
      %v395 = vsel %vm393, %v388, 0
      %v398 = vsel %vm393, %v390, 0
      %400 = vmatprep.subr.mxu0 0.0
      %401 = vmatpush1.msra.mxu0 %v391
      %402 = vmatprep.subr.mxu0 0.0
      %403 = vmatpush1.msra.mxu0 %v392
      %404 = vmatprep.subr.mxu0 0.0
      %405 = vmatpush1.msra.mxu0 0.0
      %406 = vmatprep.subr.mxu0 0.0
      %407 = vmatpush1.msra.mxu0 0.0
      %408 = vmatprep.subr.mxu0 0.0
      %409 = vmatpush1.msra.mxu0 0.0
      %410 = vmatprep.subr.mxu0 0.0
      %411 = vmatpush1.msra.mxu0 0.0
      %412 = vmatprep.subr.mxu0 0.0
      %413 = vmatpush1.msra.mxu0 0.0
      %414 = vmatprep.subr.mxu0 0.0
      %415 = vmatpush1.msra.mxu0 0.0
      %416 = vmatprep.subr.mxu0 0.0
      %417 = vmatpush1.msra.mxu0 0.0
      %418 = vmatprep.subr.mxu0 0.0
      %419 = vmatpush1.msra.mxu0 0.0
      %420 = vmatprep.subr.mxu0 0.0
      %421 = vmatpush1.msra.mxu0 0.0
      %422 = vmatprep.subr.mxu0 0.0
      %423 = vmatpush1.msra.mxu0 0.0
      %424 = vmatprep.subr.mxu0 0.0
      %425 = vmatpush1.msra.mxu0 0.0
      %426 = vmatprep.subr.mxu0 0.0
      %427 = vmatpush1.msra.mxu0 0.0
      %428 = vmatprep.subr.mxu0 0.0
      %429 = vmatpush1.msra.mxu0 0.0
      %430 = vmatprep.subr.mxu0 0.0
      %431 = vmatpush1.msra.mxu0 0.0
      %432 = vmatprep.subr.mxu0 0.0
      %433 = vmatpush1.msra.mxu0 0.0
      %434 = vmatprep.subr.mxu0 0.0
      %435 = vmatpush1.msra.mxu0 0.0
      %436 = vmatprep.subr.mxu0 0.0
      %437 = vmatpush1.msra.mxu0 0.0
      %438 = vmatprep.subr.mxu0 0.0
      %439 = vmatpush1.msra.mxu0 0.0
      %440 = vmatprep.subr.mxu0 0.0
      %441 = vmatpush1.msra.mxu0 0.0
      %442 = vmatprep.subr.mxu0 0.0
      %443 = vmatpush1.msra.mxu0 0.0
      %444 = vmatprep.subr.mxu0 0.0
      %445 = vmatpush1.msra.mxu0 0.0
      %446 = vmatprep.subr.mxu0 0.0
      %447 = vmatpush1.msra.mxu0 0.0
      %448 = vmatprep.subr.mxu0 0.0
      %449 = vmatpush1.msra.mxu0 0.0
      %450 = vmatprep.subr.mxu0 0.0
      %451 = vmatpush1.msra.mxu0 0.0
      %452 = vmatprep.subr.mxu0 0.0
      %453 = vmatpush1.msra.mxu0 0.0
      %454 = vmatprep.subr.mxu0 0.0
      %455 = vmatpush1.msra.mxu0 0.0
      %456 = vmatprep.subr.mxu0 0.0
      %457 = vmatpush1.msra.mxu0 0.0
      %458 = vmatprep.subr.mxu0 0.0
      %459 = vmatpush1.msra.mxu0 0.0
      %460 = vmatprep.subr.mxu0 0.0
      %461 = vmatpush1.msra.mxu0 0.0
      %462 = vmatprep.subr.mxu0 0.0
      %463 = vmatpush1.msra.mxu0 0.0
      %464 = vmatprep.mubr.f32.mxu0 0.0
      %465 = vmatmul.mubr.f32.gmra.mrb[0].mxu0 %v395
      %v466 = vpop.f32.mrb[0].mxu0
      %v467 = vadd.f32 0.0, %v466
      %v468 = vpop.f32.mrb[0].mxu0
      %469 = vmatprep.mubr.f32.mxu0 0.0
      %470 = vmatmul.mubr.f32.gmra.mrb[0].mxu0 %v398
      %v471 = vpop.f32.mrb[0].mxu0
      %v472 = vadd.f32 0.0, %v471
      %v473 = vpop.f32.mrb[0].mxu0
      %474 = vdwg.mxu0
      %v475 = vmul.f32 %v201, %v467
      %v476 = vmul.f32 %v202, %v472
      %477 = vst [vmem:[%s199] sm:$0xff] %v475
      %478 = vst [vmem:[%s199 + $0x8] sm:$0xff] %v476
      %s479 = smul.u32 2, %s15
      %p480 = scmp.lt.s32.totalorder %s479, 7
      %s481 = scalar_select %p480, %s479, 7
      %s482 = smul.addr %s481, 8
      %s483 = scalar_lea.vmem %s4, %s482
      // Predicated region
      $region37: #{input_senet.1} parent=35 // pred_check
        %p484 = pneg %p122
      $region38: #{input_senet.1} parent=35 // pred_check_branch
        %486 = sbr.rel (%p484) target = $region40
      $region39: #{input_senet.1} parent=35 // pred_region
        %s487 = smul.u32 2, %s15
      $region40: #{input_senet.1} parent=35 // pred_fallthru
        _
    $region36: #{input_senet.1} parent=5 // pred_fallthru
      _
    %p488 = scmp.le.s32.totalorder 2, %s10
    // Predicated region
    $region41: #{input_senet.1} parent=5 // pred_check
      %p489 = pneg %p488
    $region42: #{input_senet.1} parent=5 // pred_check_branch
      %491 = sbr.rel (%p489) target = $region44
    $region43: #{input_senet.1} parent=5 // pred_region
      %s492 = ssub.s32 %s10, 2
      // Predicated region
      $region45: #{input_senet.1} parent=43 // pred_check
        %p493 = pneg %p128
      $region46: #{input_senet.1} parent=43 // pred_check_branch
        %495 = sbr.rel (%p493) target = $region48
      $region47: #{input_senet.1} parent=43 // pred_region
        %s496 = smul.u32 2, %s16
        %p497 = scmp.lt.s32.totalorder %s496, 7
        %s498 = scalar_select %p497, %s496, 7
        %s499 = smul.addr %s498, 8
        %s500 = scalar_lea.vmem %s4, %s499
      $region48: #{input_senet.1} parent=43 // pred_fallthru
        _
    $region44: #{input_senet.1} parent=5 // pred_fallthru
      _
  $region6: #{input_senet.1} parent=0 // loop_footer
    %s14 = sadd.s32 1, %s10
  $region7: #{input_senet.1} parent=0 // loop_footer_branch
    %9 = sbr.rel target = $region3
  $region8: #{input_senet.1} parent=0 // loop_exit
    _

</llo_original>
